<compile_context>
chip_gen: v5e
topology: v5e:2x2
jax: 0.10.0
libtpu: 0.0.40
codegen_flags: <defaults>
</compile_context>

<pallas_src>
import functools

import jax
import jax.numpy as jnp
from jax import lax
from jax.experimental import pallas as pl
from jax.experimental.pallas import tpu as pltpu


def _round_up(a, b):
    return (a + b - 1) // b * b


# ---------------------------------------------------------------------------
# Kernel 1: grouped conv as a single dense (block-diagonal weight) matmul per
# (sample, row-tile), plus per-tile per-channel stats for GroupNorm.
# ---------------------------------------------------------------------------
def _conv_matmul_kernel(p_ref, w_ref, b_ref, y_ref, stat_ref, *,
                        row_tile, valid_rows, needs_mask):
    # p_ref:    (1, RT, K)       patch rows, K = KH*KW*Cin, native dtype
    # w_ref:    (K, Cout)        block-diagonal dense weight, native dtype
    # b_ref:    (1, Cout)        conv bias
    # y_ref:    (1, RT, Cout)    conv output tile
    # stat_ref: (1, 1, 2, Cout)  per-tile per-channel [sum, sum_of_squares]
    acc = jnp.dot(p_ref[0], w_ref[...], preferred_element_type=jnp.float32)
    acc = acc + b_ref[...].astype(jnp.float32)            # (RT, Cout), hoisted bias

    # single full-width (lane-dense) store of the conv result for this tile
    y_ref[0] = acc.astype(y_ref.dtype)

    # Per-channel partial sums for GroupNorm.  Rows beyond the true Ho*Wo
    # (row padding of the last tile) are masked out of the statistics.
    if needs_mask:
        row = (lax.broadcasted_iota(jnp.int32, (row_tile, 1), 0)
               + pl.program_id(1) * row_tile)
        acc = jnp.where(row < valid_rows, acc, 0.0)
    s = jnp.sum(acc, axis=0, keepdims=True)                # (1, Cout)
    q = jnp.sum(acc * acc, axis=0, keepdims=True)          # (1, Cout)
    stat_ref[0, 0, :, :] = jnp.concatenate([s, q], axis=0)


# ---------------------------------------------------------------------------
# Kernel 2: apply folded GroupNorm (per-sample per-channel scale/shift) and
# LeakyReLU(0.2), tiled the same way as kernel 1.
# ---------------------------------------------------------------------------
def _norm_act_kernel(y_ref, scale_ref, shift_ref, o_ref, *, neg_slope):
    # y_ref: (1, RT, Cout); scale/shift: (1, 1, Cout) f32; o_ref: (1, RT, Cout)
    z = y_ref[0].astype(jnp.float32) * scale_ref[0] + shift_ref[0]
    o_ref[0] = jnp.where(z >= 0, z, neg_slope * z).astype(o_ref.dtype)


class GroupConv2d:
    """JAX/Pallas port of the PyTorch GroupConv2d module (forward pass)."""

    def __init__(self, in_channels, out_channels, kernel_size, stride, padding,
                 groups, act_norm=False, *, key, dtype=jnp.float32,
                 row_tile=None):
        self.act_norm = act_norm
        if in_channels % groups != 0:
            groups = 1
        assert out_channels % groups == 0
        self.in_channels = in_channels
        self.out_channels = out_channels
        self.kernel_size = kernel_size
        self.stride = stride
        self.padding = padding
        self.groups = groups
        self.eps = 1e-5
        self.neg_slope = 0.2
        self.row_tile = row_tile   # optional override (testing / tuning)

        k_w, k_b = jax.random.split(key, 2)
        fan_in = (in_channels // groups) * kernel_size * kernel_size
        bound = 1.0 / (fan_in ** 0.5)
        # PyTorch layout: (Cout, Cin/g, KH, KW)
        self.weight = jax.random.uniform(
            k_w, (out_channels, in_channels // groups, kernel_size, kernel_size),
            dtype, -bound, bound)
        self.bias = jax.random.uniform(k_b, (out_channels,), dtype, -bound, bound)
        # GroupNorm defaults (affine=True): weight=1, bias=0
        self.gamma = jnp.ones((out_channels,), dtype)
        self.beta = jnp.zeros((out_channels,), dtype)

    def __call__(self, x):
        # x: NCHW (PyTorch convention)
        n, cin, h, w = x.shape
        assert cin == self.in_channels
        ksz, strd, pad, g = self.kernel_size, self.stride, self.padding, self.groups
        cout = self.out_channels
        cin_g, cout_g = cin // g, cout // g

        h_out = (h + 2 * pad - ksz) // strd + 1
        w_out = (w + 2 * pad - ksz) // strd + 1
        m = h_out * w_out
        kdim = ksz * ksz * cin

        # ---- wrapper-side layout plumbing (XLA) -----------------------------
        # NCHW -> NHWC, zero-pad, im2col into a lane-dense patch slab so the
        # kernel sees contiguous stride-1 rows and does one merged-K matmul.
        x_nhwc = jnp.transpose(x, (0, 2, 3, 1))
        x_pad = jnp.pad(x_nhwc, ((0, 0), (pad, pad), (pad, pad), (0, 0)))
        taps = []
        for ih in range(ksz):
            for iw in range(ksz):
                taps.append(x_pad[:, ih:ih + (h_out - 1) * strd + 1:strd,
                                  iw:iw + (w_out - 1) * strd + 1:strd, :])
        patches = jnp.concatenate(taps, axis=-1)            # (N, Ho, Wo, K)
        patches = patches.reshape(n, m, kdim)

        # Block-diagonal dense weight (K, Cout), K rows ordered (kh, kw, cin)
        # to match the patch layout.  Redundant zeros cost nothing at these sizes
        # and remove all in-kernel group slicing.
        w5 = self.weight.reshape(g, cout_g, cin_g, ksz, ksz)
        wbd = jnp.einsum("gh,goikl->gohikl",
                         jnp.eye(g, dtype=self.weight.dtype), w5)
        w_full = wbd.reshape(cout, cin, ksz, ksz)            # dense OIHW
        w_mat = jnp.transpose(w_full, (2, 3, 1, 0)).reshape(kdim, cout)

        # ---- row tiling, sized from an explicit VMEM budget (v7x-safe) ------
        itemsize = jnp.dtype(x.dtype).itemsize
        rt = self.row_tile
        if rt is None:
            vmem_budget = 8 * 1024 * 1024                    # well under 32 MiB scoped
            bytes_per_row = 2 * (kdim + 2 * cout) * itemsize  # in+out, double-buffered
            rt = max(8, min(2048, vmem_budget // bytes_per_row))
        rt = min(rt, _round_up(m, 8))
        rt = max(8, (rt // 8) * 8)                           # sublane multiple of 8
        m_pad = _round_up(m, rt)
        n_tiles = m_pad // rt
        if m_pad != m:
            patches = jnp.pad(patches, ((0, 0), (0, m_pad - m), (0, 0)))

        b2 = self.bias.reshape(1, cout)

        conv_kernel = functools.partial(
            _conv_matmul_kernel, row_tile=rt, valid_rows=m,
            needs_mask=(m_pad != m))

        cparams = pltpu.CompilerParams(
            dimension_semantics=("parallel", "parallel"),
            vmem_limit_bytes=32 * 1024 * 1024)

        y, stats = pl.pallas_call(
            conv_kernel,
            out_shape=(
                jax.ShapeDtypeStruct((n, m_pad, cout), x.dtype),
                jax.ShapeDtypeStruct((n, n_tiles, 2, cout), jnp.float32),
            ),
            grid=(n, n_tiles),
            in_specs=[
                pl.BlockSpec((1, rt, kdim), lambda i, j: (i, j, 0)),
                pl.BlockSpec((kdim, cout), lambda i, j: (0, 0)),
                pl.BlockSpec((1, cout), lambda i, j: (0, 0)),
            ],
            out_specs=(
                pl.BlockSpec((1, rt, cout), lambda i, j: (i, j, 0)),
                pl.BlockSpec((1, 1, 2, cout), lambda i, j: (i, j, 0, 0)),
            ),
            compiler_params=cparams,
        )(patches, w_mat, b2)

        if self.act_norm:
            # Tiny O(N*Cout) XLA glue: fold GroupNorm stats into per-sample,
            # per-channel scale/shift (GroupNorm over Cout_g x Ho x Wo per group).
            s_c = stats[:, :, 0, :].sum(axis=1)               # (N, Cout)
            q_c = stats[:, :, 1, :].sum(axis=1)               # (N, Cout)
            cnt = float(m * cout_g)
            mean_g = s_c.reshape(n, g, cout_g).sum(-1) / cnt  # (N, G)
            ex2_g = q_c.reshape(n, g, cout_g).sum(-1) / cnt
            var_g = ex2_g - mean_g * mean_g
            inv_g = lax.rsqrt(var_g + self.eps)               # (N, G)
            gamma = self.gamma.astype(jnp.float32).reshape(1, g, cout_g)
            beta = self.beta.astype(jnp.float32).reshape(1, g, cout_g)
            scale = (gamma * inv_g[:, :, None]).reshape(n, 1, cout)
            shift = (beta - gamma * (mean_g * inv_g)[:, :, None]).reshape(n, 1, cout)

            act_kernel = functools.partial(_norm_act_kernel,
                                           neg_slope=self.neg_slope)
            y = pl.pallas_call(
                act_kernel,
                out_shape=jax.ShapeDtypeStruct((n, m_pad, cout), x.dtype),
                grid=(n, n_tiles),
                in_specs=[
                    pl.BlockSpec((1, rt, cout), lambda i, j: (i, j, 0)),
                    pl.BlockSpec((1, 1, cout), lambda i, j: (i, 0, 0)),
                    pl.BlockSpec((1, 1, cout), lambda i, j: (i, 0, 0)),
                ],
                out_specs=pl.BlockSpec((1, rt, cout), lambda i, j: (i, j, 0)),
                compiler_params=cparams,
            )(y, scale, shift)

        y = y[:, :m].reshape(n, h_out, w_out, cout)
        return jnp.transpose(y, (0, 3, 1, 2))                 # back to NCHW


def _reference(x, mod: GroupConv2d):
    """Pure-JAX reference matching PyTorch semantics (NCHW)."""
    y = lax.conv_general_dilated(
        x, mod.weight,
        window_strides=(mod.stride, mod.stride),
        padding=[(mod.padding, mod.padding), (mod.padding, mod.padding)],
        dimension_numbers=("NCHW", "OIHW", "NCHW"),
        feature_group_count=mod.groups)
    y = y + mod.bias.reshape(1, -1, 1, 1)
    if mod.act_norm:
        n, c, hh, ww = y.shape
        g = mod.groups
        yg = y.reshape(n, g, (c // g) * hh * ww)
        mean = yg.mean(-1, keepdims=True)
        var = ((yg - mean) ** 2).mean(-1, keepdims=True)
        yn = ((yg - mean) / jnp.sqrt(var + mod.eps)).reshape(n, c, hh, ww)
        yn = yn * mod.gamma.reshape(1, -1, 1, 1) + mod.beta.reshape(1, -1, 1, 1)
        y = jnp.where(yn >= 0, yn, mod.neg_slope * yn)
    return y


if __name__ == "__main__":
    key = jax.random.PRNGKey(0)
    k_x1, k_m1, k_x2, k_m2, k_x3, k_m3 = jax.random.split(key, 6)

    # Config 1 (primary): grouped 3x3, stride 1, pad 1, GroupNorm + LeakyReLU.
    mod1 = GroupConv2d(8, 16, 3, 1, 1, groups=2, act_norm=True, key=k_m1)
    x1 = jax.random.normal(k_x1, (2, 8, 16, 16), jnp.float32)
    y1 = jax.block_until_ready(mod1(x1))
    r1 = _reference(x1, mod1)
    assert y1.shape == r1.shape == (2, 16, 16, 16)
    assert jnp.allclose(y1, r1, rtol=1e-4, atol=1e-4), float(jnp.max(jnp.abs(y1 - r1)))

    # Config 2: stride 2, 4 groups, odd spatial, small forced row tile so the
    # multi-tile + padded-row-masking stats path is exercised.
    mod2 = GroupConv2d(8, 16, 3, 2, 1, groups=4, act_norm=True, key=k_m2, row_tile=24)
    x2 = jax.random.normal(k_x2, (2, 8, 15, 15), jnp.float32)
    y2 = jax.block_until_ready(mod2(x2))
    r2 = _reference(x2, mod2)
    assert jnp.allclose(y2, r2, rtol=1e-4, atol=1e-4), float(jnp.max(jnp.abs(y2 - r2)))

    # Config 3: groups falls back to 1 (6 % 4 != 0), 5x5 kernel, no act_norm.
    mod3 = GroupConv2d(6, 8, 5, 1, 2, groups=4, act_norm=False, key=k_m3)
    x3 = jax.random.normal(k_x3, (2, 6, 9, 9), jnp.float32)
    y3 = jax.block_until_ready(mod3(x3))
    r3 = _reference(x3, mod3)
    assert jnp.allclose(y3, r3, rtol=1e-4, atol=1e-4), float(jnp.max(jnp.abs(y3 - r3)))

    print("KERNEL_OK")
</pallas_src>

<mosaic_0001>
module attributes {stable_mosaic.version = 11 : i64} {
  func.func @_conv_matmul_kernel(%arg0: i32, %arg1: i32, %arg2: memref<1x256x72xf32, #tpu.memory_space<vmem>>, %arg3: memref<72x16xf32, #tpu.memory_space<vmem>>, %arg4: memref<1x16xf32, #tpu.memory_space<vmem>>, %arg5: memref<1x256x16xf32, #tpu.memory_space<vmem>>, %arg6: memref<1x1x2x16xf32, #tpu.memory_space<vmem>>) attributes {dimension_semantics = [#tpu.dimension_semantics<parallel>, #tpu.dimension_semantics<parallel>], iteration_bounds = array<i64: 2, 1>, scalar_prefetch = 0 : i64, scratch_operands = 0 : i64, tpu.core_type = #tpu.core_type<tc>, window_params = [{transform_indices = @transform_0, window_bounds = array<i64: 1, 256, 72>}, {pipeline_mode = #tpu.pipeline_mode<synchronous>, transform_indices = @transform_1, window_bounds = array<i64: 72, 16>}, {pipeline_mode = #tpu.pipeline_mode<synchronous>, transform_indices = @transform_2, window_bounds = array<i64: 1, 16>}, {transform_indices = @transform_3, window_bounds = array<i64: 1, 256, 16>}, {transform_indices = @transform_4, window_bounds = array<i64: 1, 1, 2, 16>}]} {
    %c0 = arith.constant 0 : index
    %c0_0 = arith.constant 0 : index
    %c0_1 = arith.constant 0 : index
    %0 = vector.load %arg2[%c0, %c0_0, %c0_1] : memref<1x256x72xf32, #tpu.memory_space<vmem>>, vector<1x256x72xf32>
    %1 = vector.shape_cast %0 : vector<1x256x72xf32> to vector<256x72xf32>
    %c0_2 = arith.constant 0 : index
    %c0_3 = arith.constant 0 : index
    %2 = vector.load %arg3[%c0_2, %c0_3] : memref<72x16xf32, #tpu.memory_space<vmem>>, vector<72x16xf32>
    %cst = arith.constant dense<0.000000e+00> : vector<256x16xf32>
    %3 = tpu.matmul %1, %2, %cst {dimension_numbers = #tpu.dot_dimension_numbers<[1], [0], [0], [1], [0, 0, 1, 1], [], []>} : vector<256x72xf32>, vector<72x16xf32>, vector<256x16xf32> -> vector<256x16xf32>
    %c0_4 = arith.constant 0 : index
    %c0_5 = arith.constant 0 : index
    %4 = vector.load %arg4[%c0_4, %c0_5] : memref<1x16xf32, #tpu.memory_space<vmem>>, vector<1x16xf32>
    %5 = vector.broadcast %4 : vector<1x16xf32> to vector<256x16xf32>
    %6 = arith.addf %3, %5 : vector<256x16xf32>
    %c0_6 = arith.constant 0 : index
    %c0_7 = arith.constant 0 : index
    %c0_8 = arith.constant 0 : index
    %7 = vector.load %arg5[%c0_6, %c0_7, %c0_8] : memref<1x256x16xf32, #tpu.memory_space<vmem>>, vector<1x256x16xf32>
    %8 = vector.shape_cast %7 : vector<1x256x16xf32> to vector<256x16xf32>
    %9 = vector.shape_cast %6 : vector<256x16xf32> to vector<1x256x16xf32>
    tpu.vector_store %arg5[%c0_6, %c0_7, %c0_8], %9 {strides = array<i32>} : memref<1x256x16xf32, #tpu.memory_space<vmem>>, vector<1x256x16xf32>,
    %cst_9 = arith.constant dense<0.000000e+00> : vector<16xf32>
    %10 = vector.multi_reduction <add>, %6, %cst_9 [0] : vector<256x16xf32> to vector<16xf32>
    %11 = vector.shape_cast %10 : vector<16xf32> to vector<1x16xf32>
    %12 = arith.mulf %6, %6 : vector<256x16xf32>
    %cst_10 = arith.constant dense<0.000000e+00> : vector<16xf32>
    %13 = vector.multi_reduction <add>, %12, %cst_10 [0] : vector<256x16xf32> to vector<16xf32>
    %14 = vector.shape_cast %13 : vector<16xf32> to vector<1x16xf32>
    %15 = tpu.concatenate %11, %14 in 0 : vector<1x16xf32>, vector<1x16xf32> -> vector<2x16xf32>
    %c0_11 = arith.constant 0 : index
    %c0_12 = arith.constant 0 : index
    %c0_13 = arith.constant 0 : index
    %c0_14 = arith.constant 0 : index
    %16 = vector.load %arg6[%c0_11, %c0_12, %c0_13, %c0_14] : memref<1x1x2x16xf32, #tpu.memory_space<vmem>>, vector<1x1x2x16xf32>
    %17 = vector.shape_cast %16 : vector<1x1x2x16xf32> to vector<2x16xf32>
    %18 = vector.shape_cast %15 : vector<2x16xf32> to vector<1x1x2x16xf32>
    tpu.vector_store %arg6[%c0_11, %c0_12, %c0_13, %c0_14], %18 {strides = array<i32>} : memref<1x1x2x16xf32, #tpu.memory_space<vmem>>, vector<1x1x2x16xf32>,
    return
  }
  func.func @transform_0(%arg0: i32, %arg1: i32) -> (i32, i32, i32) {
    %c0_i32 = arith.constant 0 : i32
    %c0_i32_0 = arith.constant 0 : i32
    return %arg0, %arg1, %c0_i32 : i32, i32, i32
  }
  func.func @transform_1(%arg0: i32, %arg1: i32) -> (i32, i32) {
    %c0_i32 = arith.constant 0 : i32
    %c0_i32_0 = arith.constant 0 : i32
    %c0_i32_1 = arith.constant 0 : i32
    return %c0_i32, %c0_i32_0 : i32, i32
  }
  func.func @transform_2(%arg0: i32, %arg1: i32) -> (i32, i32) {
    %c0_i32 = arith.constant 0 : i32
    %c0_i32_0 = arith.constant 0 : i32
    %c0_i32_1 = arith.constant 0 : i32
    return %c0_i32, %c0_i32_0 : i32, i32
  }
  func.func @transform_3(%arg0: i32, %arg1: i32) -> (i32, i32, i32) {
    %c0_i32 = arith.constant 0 : i32
    %c0_i32_0 = arith.constant 0 : i32
    return %arg0, %arg1, %c0_i32 : i32, i32, i32
  }
  func.func @transform_4(%arg0: i32, %arg1: i32) -> (i32, i32, i32, i32) {
    %c0_i32 = arith.constant 0 : i32
    %c0_i32_0 = arith.constant 0 : i32
    %c0_i32_1 = arith.constant 0 : i32
    return %arg0, %arg1, %c0_i32, %c0_i32_0 : i32, i32, i32, i32
  }
}

</mosaic_0001>

<llo_original>
// kernel: tpu_custom_call.1
$region0: #{tpu_custom_call.1}
  #allocation0 [shape = 'u32[]', space=smem, size = 0x4, offset = 0x4, fixed_abs, tag = 'smem constant byte address 0x4 - core index']
  #allocation1 [shape = 'u32[72,128]{1,0:T(1,128)}', space=vmem, size = 0x9000, scoped, tag = 'internal scratch']
  %s0 = inlined_call_operand.vmem [shape: f32[2,256,72], index: 0, kind: input, shape index: {}]
  %s1 = inlined_call_operand.vmem [shape: f32[72,16], index: 1, kind: input, shape index: {}]
  %s2 = inlined_call_operand.vmem [shape: f32[1,16], index: 2, kind: input, shape index: {}]
  %s3 = inlined_call_operand.vmem [shape: f32[2,256,16], index: 3, kind: output, shape index: {0}]
  %s4 = inlined_call_operand.hbm [shape: f32[2,1,2,16], index: 4, kind: output, shape index: {1}]
  %5 = xla_tuple %s3, %s4
  %s6 = sld [smem:[#allocation0]]
  $region53: #{tpu_custom_call.1} parent=0
    _
  %s8 = ssub.s32 1, %s6
  %s9 = scalar_select 0, %s8, %s6
  $region1: #{tpu_custom_call.1} parent=0
    #allocation2 [shape = 'u8[2048]{0}', space=vmem, size = 0x800, scoped, tag = 'output window, operand 1']
    #allocation3 [shape = 's32[2]{0}', space=sflag, size = 0x8, scoped, tag = 'scoped memory for tpu_custom_call.1']
    %10 = vsyncpa [#allocation3], 0
    %s11 = scalar_lea.sflag [#allocation3], 1
    %12 = vsyncpa %s11, 0
    loop: start=0, step=1, limit=4
    $region2: #{tpu_custom_call.1} parent=1 // loop_pre_header
      _
    $region3: #{tpu_custom_call.1} parent=1 // loop_header
      %s14 = sphi 0, %s18
      %p15 = scmp.ge.s32.totalorder %s14, 4
      %s21 = sphi 0, %s33
      %s22 = sphi 0, %s29
      %s23 = sphi 0, %s21
      %s24 = sphi 0, %s22
      %s25 = sphi 0, %s23
      %s26 = sphi 0, %s24
      %s38 = sphi 0, %s40
      %s41 = sphi 0, %s38
      %s42 = sphi 0, %s41
      %s58 = sphi 0, %s42
      %s62 = sphi 0, %s62
      %s64 = sphi 0, %s62
      %s65 = sphi 0, %s64
      %s79 = sphi 0, %s65
      %s83 = sphi 0, %s83
      %s85 = sphi 0, %s83
      %s86 = sphi 0, %s85
      %s100 = sphi 0, %s86
      %s108 = sphi 0, %s110
      %s111 = sphi 0, %s108
      %s112 = sphi 0, %s111
      %s128 = sphi 0, %s112
      %s136 = sphi 0, %s138
      %s139 = sphi 0, %s136
      %s140 = sphi 0, %s139
      %s156 = sphi 0, %s140
    $region4: #{tpu_custom_call.1} parent=1 // loop_header_branch
      %17 = sbr.rel (%p15) target = $region8
    $region5: #{tpu_custom_call.1} parent=1 // loop_body
      %s19 = ssub.s32 %s14, 1
      %s20 = ssub.s32 %s14, 2
      %s27 = sadd.s32 1, %s22
      %p28 = scmp.ge.s32.totalorder %s27, 1
      %s29 = scalar_select %p28, 0, %s27
      %s30 = sadd.s32 1, %s21
      %s31 = scalar_select %p28, %s30, %s21
      %p32 = scmp.ge.s32.totalorder %s31, 2
      %s33 = scalar_select %p32, 0, %s31
      %s34 = ssub.s32 %s21, %s33
      %s35 = ssub.s32 %s22, %s29
      %s36 = sor.u32 %s34, %s35
      %p37 = scmp.eq.s32.totalorder %s36, 0
      %s39 = sadd.s32 %s38, 1
      %s40 = scalar_select %p37, %s38, %s39
      %p43 = pneg %p37
      %p44 = scmp.eq.s32.totalorder %s14, 1
      %p45 = por %p43, %p44
      %p46 = scmp.ne.s32.totalorder %s38, %s41
      %p47 = scmp.eq.s32.totalorder %s14, 0
      %p48 = por %p46, %p47
      %p49 = scmp.ne.s32.totalorder %s38, %s41
      %p50 = scmp.eq.s32.totalorder %s19, 1
      %p51 = por %p49, %p50
      %p52 = scmp.ne.s32.totalorder %s41, %s42
      %p53 = scmp.eq.s32.totalorder %s19, 0
      %p54 = por %p52, %p53
      %p55 = scmp.ne.s32.totalorder %s41, %s42
      %p56 = scmp.eq.s32.totalorder %s20, 1
      %p57 = por %p55, %p56
      %p59 = scmp.ne.s32.totalorder %s42, %s58
      %p60 = scmp.eq.s32.totalorder %s20, 0
      %p61 = por %p59, %p60
      %s63 = sadd.s32 %s62, 1
      %p66 = scmp.eq.s32.totalorder %s14, 1
      %p67 = scmp.ne.s32.totalorder %s62, %s64
      %p68 = scmp.eq.s32.totalorder %s14, 0
      %p69 = por %p67, %p68
      %p70 = scmp.ne.s32.totalorder %s62, %s64
      %p71 = scmp.eq.s32.totalorder %s19, 1
      %p72 = por %p70, %p71
      %p73 = scmp.ne.s32.totalorder %s64, %s65
      %p74 = scmp.eq.s32.totalorder %s19, 0
      %p75 = por %p73, %p74
      %p76 = scmp.ne.s32.totalorder %s64, %s65
      %p77 = scmp.eq.s32.totalorder %s20, 1
      %p78 = por %p76, %p77
      %p80 = scmp.ne.s32.totalorder %s65, %s79
      %p81 = scmp.eq.s32.totalorder %s20, 0
      %p82 = por %p80, %p81
      %s84 = sadd.s32 %s83, 1
      %p87 = scmp.eq.s32.totalorder %s14, 1
      %p88 = scmp.ne.s32.totalorder %s83, %s85
      %p89 = scmp.eq.s32.totalorder %s14, 0
      %p90 = por %p88, %p89
      %p91 = scmp.ne.s32.totalorder %s83, %s85
      %p92 = scmp.eq.s32.totalorder %s19, 1
      %p93 = por %p91, %p92
      %p94 = scmp.ne.s32.totalorder %s85, %s86
      %p95 = scmp.eq.s32.totalorder %s19, 0
      %p96 = por %p94, %p95
      %p97 = scmp.ne.s32.totalorder %s85, %s86
      %p98 = scmp.eq.s32.totalorder %s20, 1
      %p99 = por %p97, %p98
      %p101 = scmp.ne.s32.totalorder %s86, %s100
      %p102 = scmp.eq.s32.totalorder %s20, 0
      %p103 = por %p101, %p102
      %s104 = ssub.s32 %s21, %s33
      %s105 = ssub.s32 %s22, %s29
      %s106 = sor.u32 %s104, %s105
      %p107 = scmp.eq.s32.totalorder %s106, 0
      %s109 = sadd.s32 %s108, 1
      %s110 = scalar_select %p107, %s108, %s109
      %p113 = pneg %p107
      %p114 = scmp.eq.s32.totalorder %s14, 1
      %p115 = por %p113, %p114
      %p116 = scmp.ne.s32.totalorder %s108, %s111
      %p117 = scmp.eq.s32.totalorder %s14, 0
      %p118 = por %p116, %p117
      %p119 = scmp.ne.s32.totalorder %s108, %s111
      %p120 = scmp.eq.s32.totalorder %s19, 1
      %p121 = por %p119, %p120
      %p122 = scmp.ne.s32.totalorder %s111, %s112
      %p123 = scmp.eq.s32.totalorder %s19, 0
      %p124 = por %p122, %p123
      %p125 = scmp.ne.s32.totalorder %s111, %s112
      %p126 = scmp.eq.s32.totalorder %s20, 1
      %p127 = por %p125, %p126
      %p129 = scmp.ne.s32.totalorder %s112, %s128
      %p130 = scmp.eq.s32.totalorder %s20, 0
      %p131 = por %p129, %p130
      %s132 = ssub.s32 %s21, %s33
      %s133 = ssub.s32 %s22, %s29
      %s134 = sor.u32 %s132, %s133
      %p135 = scmp.eq.s32.totalorder %s134, 0
      %s137 = sadd.s32 %s136, 1
      %s138 = scalar_select %p135, %s136, %s137
      %p141 = pneg %p135
      %p142 = scmp.eq.s32.totalorder %s14, 1
      %p143 = por %p141, %p142
      %p144 = scmp.ne.s32.totalorder %s136, %s139
      %p145 = scmp.eq.s32.totalorder %s14, 0
      %p146 = por %p144, %p145
      %p147 = scmp.ne.s32.totalorder %s136, %s139
      %p148 = scmp.eq.s32.totalorder %s19, 1
      %p149 = por %p147, %p148
      %p150 = scmp.ne.s32.totalorder %s139, %s140
      %p151 = scmp.eq.s32.totalorder %s19, 0
      %p152 = por %p150, %p151
      %p153 = scmp.ne.s32.totalorder %s139, %s140
      %p154 = scmp.eq.s32.totalorder %s20, 1
      %p155 = por %p153, %p154
      %p157 = scmp.ne.s32.totalorder %s140, %s156
      %p158 = scmp.eq.s32.totalorder %s20, 0
      %p159 = por %p157, %p158
      %p160 = scmp.le.s32.totalorder 1, %s14
      %p161 = scmp.lt.s32.totalorder %s14, 3
      %p162 = pnand %p160, %p161
      %p163 = pneg %p162
      // Predicated region
      $region9: #{tpu_custom_call.1} parent=5 // pred_check
        _
      $region10: #{tpu_custom_call.1} parent=5 // pred_check_branch
        %165 = sbr.rel (%p162) target = $region12
      $region11: #{tpu_custom_call.1} parent=5 // pred_region
        %s166 = ssub.s32 %s14, 1
        // Predicated region
        $region13: #{tpu_custom_call.1} parent=11 // pred_check
          %p167 = pneg %p75
        $region14: #{tpu_custom_call.1} parent=11 // pred_check_branch
          %169 = sbr.rel (%p167) target = $region16
        $region15: #{tpu_custom_call.1} parent=11 // pred_region
          _
        $region16: #{tpu_custom_call.1} parent=11 // pred_fallthru
          _
        // Predicated region
        $region17: #{tpu_custom_call.1} parent=11 // pred_check
          %p170 = pneg %p96
        $region18: #{tpu_custom_call.1} parent=11 // pred_check_branch
          %172 = sbr.rel (%p170) target = $region20
        $region19: #{tpu_custom_call.1} parent=11 // pred_region
          _
        $region20: #{tpu_custom_call.1} parent=11 // pred_fallthru
          _
      $region12: #{tpu_custom_call.1} parent=5 // pred_fallthru
        _
      %p173 = scmp.lt.s32.totalorder %s14, 2
      // Predicated region
      $region21: #{tpu_custom_call.1} parent=5 // pred_check
        %p174 = pneg %p173
      $region22: #{tpu_custom_call.1} parent=5 // pred_check_branch
        %176 = sbr.rel (%p174) target = $region24
      $region23: #{tpu_custom_call.1} parent=5 // pred_region
        // Predicated region
        $region25: #{tpu_custom_call.1} parent=23 // pred_check
          %p177 = pneg %p48
        $region26: #{tpu_custom_call.1} parent=23 // pred_check_branch
          %179 = sbr.rel (%p177) target = $region28
        $region27: #{tpu_custom_call.1} parent=23 // pred_region
          %s180 = smul.u32 32, %s22
          %p181 = scmp.lt.s32.totalorder %s21, 1
          %s182 = scalar_select %p181, %s21, 1
          %p183 = scmp.lt.s32.totalorder %s180, 31
          %s184 = scalar_select %p183, %s180, 31
          %s185 = smul.addr %s182, 32
          %s186 = sadd.s32 %s184, %s185
          %s187 = smul.addr %s186, 8
          %s188 = scalar_lea.vmem %s0, %s187
          %s189 = smul.u32 32, %s22
        $region28: #{tpu_custom_call.1} parent=23 // pred_fallthru
          _
      $region24: #{tpu_custom_call.1} parent=5 // pred_fallthru
        _
      %p190 = scmp.le.s32.totalorder 1, %s14
      %p191 = scmp.lt.s32.totalorder %s14, 3
      %p192 = pnand %p190, %p191
      %p193 = pneg %p192
      // Predicated region
      $region29: #{tpu_custom_call.1} parent=5 // pred_check
        _
      $region30: #{tpu_custom_call.1} parent=5 // pred_check_branch
        %195 = sbr.rel (%p192) target = $region32
      $region31: #{tpu_custom_call.1} parent=5 // pred_region
        %s196 = ssub.s32 %s14, 1
        %s197 = smul.u32 32, %s24
        %p198 = scmp.lt.s32.totalorder %s23, 1
        %s199 = scalar_select %p198, %s23, 1
        %p200 = scmp.lt.s32.totalorder %s197, 31
        %s201 = scalar_select %p200, %s197, 31
        %s202 = smul.addr %s199, 32
        %s203 = sadd.s32 %s201, %s202
        %s204 = smul.addr %s203, 8
        %s205 = scalar_lea.vmem %s0, %s204
        %p206 = pneg %p54
        %p207 = pneg %p51
        %p208 = pneg %p75
        %p209 = pneg %p72
        %p210 = pneg %p96
        %p211 = pneg %p93
        %p212 = pneg %p124
        %p213 = pneg %p121
        %s214 = smul.u32 32, %s24
        %p215 = scmp.lt.s32.totalorder %s23, 1
        %s216 = scalar_select %p215, %s23, 1
        %p217 = scmp.lt.s32.totalorder %s214, 31
        %s218 = scalar_select %p217, %s214, 31
        %s219 = smul.addr %s216, 32
        %s220 = sadd.s32 %s218, %s219
        %s221 = smul.addr %s220, 8
        %s222 = scalar_lea.vmem %s3, %s221
        %p223 = pneg %p152
        %p224 = pneg %p149
        %s225 = sand.u32 %s139, 1
        %s226 = scalar_lea.sflag [#allocation3], %s225
        %s227 = sand.u32 %s139, 1
        %s228 = smul.addr %s227, 2
        %s229 = scalar_lea.vmem [#allocation2], %s228
        %s230 = smul.u32 32, %s24
        %p231 = scmp.lt.s32.totalorder %s23, 1
        %s232 = scalar_select %p231, %s23, 1
        %p233 = scmp.lt.s32.totalorder %s230, 31
        %s234 = scalar_select %p233, %s230, 31
        %s235 = smul.addr %s232, 32
        %s236 = sadd.s32 %s234, %s235
        %s237 = smul.addr %s236, 8
        %s238 = scalar_lea.vmem %s0, %s237
        %s239 = smul.u32 32, %s24
        %s240 = smul.u32 32, %s24
        %p241 = scmp.lt.s32.totalorder %s23, 1
        %s242 = scalar_select %p241, %s23, 1
        %p243 = scmp.lt.s32.totalorder %s240, 31
        %s244 = scalar_select %p243, %s240, 31
        %s245 = smul.addr %s242, 32
        %s246 = sadd.s32 %s244, %s245
        %s247 = smul.addr %s246, 8
        %s248 = scalar_lea.vmem %s3, %s247
        %s249 = smul.u32 32, %s24
        %v250 = vld [vmem:[%s238] sm:$0xff]
        %v251 = vld [vmem:[%s238 + $0x8] sm:$0xff]
        %v252 = vld [vmem:[%s238 + $0x10] sm:$0xff]
        %v253 = vld [vmem:[%s238 + $0x18] sm:$0xff]
        %v254 = vld [vmem:[%s238 + $0x20] sm:$0xff]
        %v255 = vld [vmem:[%s238 + $0x28] sm:$0xff]
        %v256 = vld [vmem:[%s238 + $0x30] sm:$0xff]
        %v257 = vld [vmem:[%s238 + $0x38] sm:$0xff]
        %v258 = vld [vmem:[%s238 + $0x40] sm:$0xff]
        %v259 = vld [vmem:[%s238 + $0x48] sm:$0xff]
        %v260 = vld [vmem:[%s238 + $0x50] sm:$0xff]
        %v261 = vld [vmem:[%s238 + $0x58] sm:$0xff]
        %v262 = vld [vmem:[%s238 + $0x60] sm:$0xff]
        %v263 = vld [vmem:[%s238 + $0x68] sm:$0xff]
        %v264 = vld [vmem:[%s238 + $0x70] sm:$0xff]
        %v265 = vld [vmem:[%s238 + $0x78] sm:$0xff]
        %v266 = vld [vmem:[%s238 + $0x80] sm:$0xff]
        %v267 = vld [vmem:[%s238 + $0x88] sm:$0xff]
        %v268 = vld [vmem:[%s238 + $0x90] sm:$0xff]
        %v269 = vld [vmem:[%s238 + $0x98] sm:$0xff]
        %v270 = vld [vmem:[%s238 + $0xa0] sm:$0xff]
        %v271 = vld [vmem:[%s238 + $0xa8] sm:$0xff]
        %v272 = vld [vmem:[%s238 + $0xb0] sm:$0xff]
        %v273 = vld [vmem:[%s238 + $0xb8] sm:$0xff]
        %v274 = vld [vmem:[%s238 + $0xc0] sm:$0xff]
        %v275 = vld [vmem:[%s238 + $0xc8] sm:$0xff]
        %v276 = vld [vmem:[%s238 + $0xd0] sm:$0xff]
        %v277 = vld [vmem:[%s238 + $0xd8] sm:$0xff]
        %v278 = vld [vmem:[%s238 + $0xe0] sm:$0xff]
        %v279 = vld [vmem:[%s238 + $0xe8] sm:$0xff]
        %v280 = vld [vmem:[%s238 + $0xf0] sm:$0xff]
        %v281 = vld [vmem:[%s238 + $0xf8] sm:$0xff]
        %v282 = vld [vmem:[%s1] sm:$0xff]
        %v283 = vld [vmem:[%s1 + $0x8] sm:$0xff]
        %v284 = vld [vmem:[%s1 + $0x10] sm:$0xff]
        %v285 = vld [vmem:[%s1 + $0x18] sm:$0xff]
        %v286 = vld [vmem:[%s1 + $0x20] sm:$0xff]
        %v287 = vld [vmem:[%s1 + $0x28] sm:$0xff]
        %v288 = vld [vmem:[%s1 + $0x30] sm:$0xff]
        %v289 = vld [vmem:[%s1 + $0x38] sm:$0xff]
        %v290 = vld [vmem:[%s1 + $0x40] sm:$0xff]
        %v291 = vld [vmem:[%s2] sm:$0x1]
        %v293 = vperm.slane %v291, 0
        %vm295 = vcmask 588800
        %v297 = vsel %vm295, %v250, 0
        %v300 = vsel %vm295, %v251, 0
        %v303 = vsel %vm295, %v252, 0
        %v306 = vsel %vm295, %v253, 0
        %v309 = vsel %vm295, %v254, 0
        %v312 = vsel %vm295, %v255, 0
        %v315 = vsel %vm295, %v256, 0
        %v318 = vsel %vm295, %v257, 0
        %v321 = vsel %vm295, %v258, 0
        %v324 = vsel %vm295, %v259, 0
        %v327 = vsel %vm295, %v260, 0
        %v330 = vsel %vm295, %v261, 0
        %v333 = vsel %vm295, %v262, 0
        %v336 = vsel %vm295, %v263, 0
        %v339 = vsel %vm295, %v264, 0
        %v342 = vsel %vm295, %v265, 0
        %v345 = vsel %vm295, %v266, 0
        %v348 = vsel %vm295, %v267, 0
        %v351 = vsel %vm295, %v268, 0
        %v354 = vsel %vm295, %v269, 0
        %v357 = vsel %vm295, %v270, 0
        %v360 = vsel %vm295, %v271, 0
        %v363 = vsel %vm295, %v272, 0
        %v366 = vsel %vm295, %v273, 0
        %v369 = vsel %vm295, %v274, 0
        %v372 = vsel %vm295, %v275, 0
        %v375 = vsel %vm295, %v276, 0
        %v378 = vsel %vm295, %v277, 0
        %v381 = vsel %vm295, %v278, 0
        %v384 = vsel %vm295, %v279, 0
        %v387 = vsel %vm295, %v280, 0
        %v390 = vsel %vm295, %v281, 0
        %392 = vmatpush.msra.mxu0 0.0
        %393 = vmatpush.msra.mxu0 0.0
        %394 = vmatpush.msra.mxu0 0.0
        %395 = vmatpush.msra.mxu0 0.0
        %396 = vmatpush.msra.mxu0 0.0
        %397 = vmatpush.msra.mxu0 0.0
        %398 = vmatpush.msra.mxu0 0.0
        %399 = vmatpush.msra.mxu0 %v290
        %400 = vmatpush.msra.mxu0 %v289
        %401 = vmatpush.msra.mxu0 %v288
        %402 = vmatpush.msra.mxu0 %v287
        %403 = vmatpush.msra.mxu0 %v286
        %404 = vmatpush.msra.mxu0 %v285
        %405 = vmatpush.msra.mxu0 %v284
        %406 = vmatpush.msra.mxu0 %v283
        %407 = vmatpush.msra.mxu0 %v282
        %408 = vmatmul.f32.gmra.mxu0 %v297
        %v409 = vpop.f32.mrf.mxu0
        %v410 = vadd.f32 %v293, %v409
        %411 = vmatmul.f32.gmra.mxu0 %v300
        %v412 = vpop.f32.mrf.mxu0
        %v413 = vadd.f32 %v293, %v412
        %414 = vmatmul.f32.gmra.mxu0 %v303
        %v415 = vpop.f32.mrf.mxu0
        %v416 = vadd.f32 %v293, %v415
        %417 = vmatmul.f32.gmra.mxu0 %v306
        %v418 = vpop.f32.mrf.mxu0
        %v419 = vadd.f32 %v293, %v418
        %420 = vmatmul.f32.gmra.mxu0 %v309
        %v421 = vpop.f32.mrf.mxu0
        %v422 = vadd.f32 %v293, %v421
        %423 = vmatmul.f32.gmra.mxu0 %v312
        %v424 = vpop.f32.mrf.mxu0
        %v425 = vadd.f32 %v293, %v424
        %426 = vmatmul.f32.gmra.mxu0 %v315
        %v427 = vpop.f32.mrf.mxu0
        %v428 = vadd.f32 %v293, %v427
        %429 = vmatmul.f32.gmra.mxu0 %v318
        %v430 = vpop.f32.mrf.mxu0
        %v431 = vadd.f32 %v293, %v430
        %432 = vmatmul.f32.gmra.mxu0 %v321
        %v433 = vpop.f32.mrf.mxu0
        %v434 = vadd.f32 %v293, %v433
        %435 = vmatmul.f32.gmra.mxu0 %v324
        %v436 = vpop.f32.mrf.mxu0
        %v437 = vadd.f32 %v293, %v436
        %438 = vmatmul.f32.gmra.mxu0 %v327
        %v439 = vpop.f32.mrf.mxu0
        %v440 = vadd.f32 %v293, %v439
        %441 = vmatmul.f32.gmra.mxu0 %v330
        %v442 = vpop.f32.mrf.mxu0
        %v443 = vadd.f32 %v293, %v442
        %444 = vmatmul.f32.gmra.mxu0 %v333
        %v445 = vpop.f32.mrf.mxu0
        %v446 = vadd.f32 %v293, %v445
        %447 = vmatmul.f32.gmra.mxu0 %v336
        %v448 = vpop.f32.mrf.mxu0
        %v449 = vadd.f32 %v293, %v448
        %450 = vmatmul.f32.gmra.mxu0 %v339
        %v451 = vpop.f32.mrf.mxu0
        %v452 = vadd.f32 %v293, %v451
        %453 = vmatmul.f32.gmra.mxu0 %v342
        %v454 = vpop.f32.mrf.mxu0
        %v455 = vadd.f32 %v293, %v454
        %456 = vmatmul.f32.gmra.mxu0 %v345
        %v457 = vpop.f32.mrf.mxu0
        %v458 = vadd.f32 %v293, %v457
        %459 = vmatmul.f32.gmra.mxu0 %v348
        %v460 = vpop.f32.mrf.mxu0
        %v461 = vadd.f32 %v293, %v460
        %462 = vmatmul.f32.gmra.mxu0 %v351
        %v463 = vpop.f32.mrf.mxu0
        %v464 = vadd.f32 %v293, %v463
        %465 = vmatmul.f32.gmra.mxu0 %v354
        %v466 = vpop.f32.mrf.mxu0
        %v467 = vadd.f32 %v293, %v466
        %468 = vmatmul.f32.gmra.mxu0 %v357
        %v469 = vpop.f32.mrf.mxu0
        %v470 = vadd.f32 %v293, %v469
        %471 = vmatmul.f32.gmra.mxu0 %v360
        %v472 = vpop.f32.mrf.mxu0
        %v473 = vadd.f32 %v293, %v472
        %474 = vmatmul.f32.gmra.mxu0 %v363
        %v475 = vpop.f32.mrf.mxu0
        %v476 = vadd.f32 %v293, %v475
        %477 = vmatmul.f32.gmra.mxu0 %v366
        %v478 = vpop.f32.mrf.mxu0
        %v479 = vadd.f32 %v293, %v478
        %480 = vmatmul.f32.gmra.mxu0 %v369
        %v481 = vpop.f32.mrf.mxu0
        %v482 = vadd.f32 %v293, %v481
        %483 = vmatmul.f32.gmra.mxu0 %v372
        %v484 = vpop.f32.mrf.mxu0
        %v485 = vadd.f32 %v293, %v484
        %486 = vmatmul.f32.gmra.mxu0 %v375
        %v487 = vpop.f32.mrf.mxu0
        %v488 = vadd.f32 %v293, %v487
        %489 = vmatmul.f32.gmra.mxu0 %v378
        %v490 = vpop.f32.mrf.mxu0
        %v491 = vadd.f32 %v293, %v490
        %492 = vmatmul.f32.gmra.mxu0 %v381
        %v493 = vpop.f32.mrf.mxu0
        %v494 = vadd.f32 %v293, %v493
        %495 = vmatmul.f32.gmra.mxu0 %v384
        %v496 = vpop.f32.mrf.mxu0
        %v497 = vadd.f32 %v293, %v496
        %498 = vmatmul.f32.gmra.mxu0 %v387
        %v499 = vpop.f32.mrf.mxu0
        %v500 = vadd.f32 %v293, %v499
        %501 = vmatmul.f32.gmra.mxu0 %v390
        %v502 = vpop.f32.mrf.mxu0
        %v503 = vadd.f32 %v293, %v502
        %504 = vdwg.mxu0
        %vm505 = vcmask 130048
        %506 = vst.msk [vmem:[%s248] sm:$0xff] %vm505, %v410
        %507 = vst.msk [vmem:[%s248 + $0x8] sm:$0xff] %vm505, %v413
        %508 = vst.msk [vmem:[%s248 + $0x10] sm:$0xff] %vm505, %v416
        %509 = vst.msk [vmem:[%s248 + $0x18] sm:$0xff] %vm505, %v419
        %510 = vst.msk [vmem:[%s248 + $0x20] sm:$0xff] %vm505, %v422
        %511 = vst.msk [vmem:[%s248 + $0x28] sm:$0xff] %vm505, %v425
        %512 = vst.msk [vmem:[%s248 + $0x30] sm:$0xff] %vm505, %v428
        %513 = vst.msk [vmem:[%s248 + $0x38] sm:$0xff] %vm505, %v431
        %514 = vst.msk [vmem:[%s248 + $0x40] sm:$0xff] %vm505, %v434
        %515 = vst.msk [vmem:[%s248 + $0x48] sm:$0xff] %vm505, %v437
        %516 = vst.msk [vmem:[%s248 + $0x50] sm:$0xff] %vm505, %v440
        %517 = vst.msk [vmem:[%s248 + $0x58] sm:$0xff] %vm505, %v443
        %518 = vst.msk [vmem:[%s248 + $0x60] sm:$0xff] %vm505, %v446
        %519 = vst.msk [vmem:[%s248 + $0x68] sm:$0xff] %vm505, %v449
        %520 = vst.msk [vmem:[%s248 + $0x70] sm:$0xff] %vm505, %v452
        %521 = vst.msk [vmem:[%s248 + $0x78] sm:$0xff] %vm505, %v455
        %522 = vst.msk [vmem:[%s248 + $0x80] sm:$0xff] %vm505, %v458
        %523 = vst.msk [vmem:[%s248 + $0x88] sm:$0xff] %vm505, %v461
        %524 = vst.msk [vmem:[%s248 + $0x90] sm:$0xff] %vm505, %v464
        %525 = vst.msk [vmem:[%s248 + $0x98] sm:$0xff] %vm505, %v467
        %526 = vst.msk [vmem:[%s248 + $0xa0] sm:$0xff] %vm505, %v470
        %527 = vst.msk [vmem:[%s248 + $0xa8] sm:$0xff] %vm505, %v473
        %528 = vst.msk [vmem:[%s248 + $0xb0] sm:$0xff] %vm505, %v476
        %529 = vst.msk [vmem:[%s248 + $0xb8] sm:$0xff] %vm505, %v479
        %530 = vst.msk [vmem:[%s248 + $0xc0] sm:$0xff] %vm505, %v482
        %531 = vst.msk [vmem:[%s248 + $0xc8] sm:$0xff] %vm505, %v485
        %532 = vst.msk [vmem:[%s248 + $0xd0] sm:$0xff] %vm505, %v488
        %533 = vst.msk [vmem:[%s248 + $0xd8] sm:$0xff] %vm505, %v491
        %534 = vst.msk [vmem:[%s248 + $0xe0] sm:$0xff] %vm505, %v494
        %535 = vst.msk [vmem:[%s248 + $0xe8] sm:$0xff] %vm505, %v497
        %536 = vst.msk [vmem:[%s248 + $0xf0] sm:$0xff] %vm505, %v500
        %537 = vst.msk [vmem:[%s248 + $0xf8] sm:$0xff] %vm505, %v503
        %v538 = vsel %vm505, %v410, 0.0
        %v539 = vsel %vm505, %v413, 0.0
        %v540 = vadd.f32 %v538, %v539
        %v541 = vsel %vm505, %v416, 0.0
        %v542 = vadd.f32 %v540, %v541
        %v543 = vsel %vm505, %v419, 0.0
        %v544 = vadd.f32 %v542, %v543
        %v545 = vsel %vm505, %v422, 0.0
        %v546 = vadd.f32 %v544, %v545
        %v547 = vsel %vm505, %v425, 0.0
        %v548 = vadd.f32 %v546, %v547
        %v549 = vsel %vm505, %v428, 0.0
        %v550 = vadd.f32 %v548, %v549
        %v551 = vsel %vm505, %v431, 0.0
        %v552 = vadd.f32 %v550, %v551
        %v553 = vsel %vm505, %v434, 0.0
        %v554 = vadd.f32 %v552, %v553
        %v555 = vsel %vm505, %v437, 0.0
        %v556 = vadd.f32 %v554, %v555
        %v557 = vsel %vm505, %v440, 0.0
        %v558 = vadd.f32 %v556, %v557
        %v559 = vsel %vm505, %v443, 0.0
        %v560 = vadd.f32 %v558, %v559
        %v561 = vsel %vm505, %v446, 0.0
        %v562 = vadd.f32 %v560, %v561
        %v563 = vsel %vm505, %v449, 0.0
        %v564 = vadd.f32 %v562, %v563
        %v565 = vsel %vm505, %v452, 0.0
        %v566 = vadd.f32 %v564, %v565
        %v567 = vsel %vm505, %v455, 0.0
        %v568 = vadd.f32 %v566, %v567
        %v569 = vsel %vm505, %v458, 0.0
        %v570 = vadd.f32 %v568, %v569
        %v571 = vsel %vm505, %v461, 0.0
        %v572 = vadd.f32 %v570, %v571
        %v573 = vsel %vm505, %v464, 0.0
        %v574 = vadd.f32 %v572, %v573
        %v575 = vsel %vm505, %v467, 0.0
        %v576 = vadd.f32 %v574, %v575
        %v577 = vsel %vm505, %v470, 0.0
        %v578 = vadd.f32 %v576, %v577
        %v579 = vsel %vm505, %v473, 0.0
        %v580 = vadd.f32 %v578, %v579
        %v581 = vsel %vm505, %v476, 0.0
        %v582 = vadd.f32 %v580, %v581
        %v583 = vsel %vm505, %v479, 0.0
        %v584 = vadd.f32 %v582, %v583
        %v585 = vsel %vm505, %v482, 0.0
        %v586 = vadd.f32 %v584, %v585
        %v587 = vsel %vm505, %v485, 0.0
        %v588 = vadd.f32 %v586, %v587
        %v589 = vsel %vm505, %v488, 0.0
        %v590 = vadd.f32 %v588, %v589
        %v591 = vsel %vm505, %v491, 0.0
        %v592 = vadd.f32 %v590, %v591
        %v593 = vsel %vm505, %v494, 0.0
        %v594 = vadd.f32 %v592, %v593
        %v595 = vsel %vm505, %v497, 0.0
        %v596 = vadd.f32 %v594, %v595
        %v597 = vsel %vm505, %v500, 0.0
        %v598 = vadd.f32 %v596, %v597
        %v599 = vsel %vm505, %v503, 0.0
        %v600 = vadd.f32 %v598, %v599
        %v601 = vrot.slane %v600, 4
        %v602 = vadd.f32 %v600, %v601
        %v603 = vrot.slane %v602, 2
        %v604 = vadd.f32 %v602, %v603
        %v605 = vrot.slane %v604, 1
        %v606 = vadd.f32 %v604, %v605
        %v607 = vmul.f32 %v410, %v410
        %v608 = vmul.f32 %v413, %v413
        %v609 = vmul.f32 %v416, %v416
        %v610 = vmul.f32 %v419, %v419
        %v611 = vmul.f32 %v422, %v422
        %v612 = vmul.f32 %v425, %v425
        %v613 = vmul.f32 %v428, %v428
        %v614 = vmul.f32 %v431, %v431
        %v615 = vmul.f32 %v434, %v434
        %v616 = vmul.f32 %v437, %v437
        %v617 = vmul.f32 %v440, %v440
        %v618 = vmul.f32 %v443, %v443
        %v619 = vmul.f32 %v446, %v446
        %v620 = vmul.f32 %v449, %v449
        %v621 = vmul.f32 %v452, %v452
        %v622 = vmul.f32 %v455, %v455
        %v623 = vmul.f32 %v458, %v458
        %v624 = vmul.f32 %v461, %v461
        %v625 = vmul.f32 %v464, %v464
        %v626 = vmul.f32 %v467, %v467
        %v627 = vmul.f32 %v470, %v470
        %v628 = vmul.f32 %v473, %v473
        %v629 = vmul.f32 %v476, %v476
        %v630 = vmul.f32 %v479, %v479
        %v631 = vmul.f32 %v482, %v482
        %v632 = vmul.f32 %v485, %v485
        %v633 = vmul.f32 %v488, %v488
        %v634 = vmul.f32 %v491, %v491
        %v635 = vmul.f32 %v494, %v494
        %v636 = vmul.f32 %v497, %v497
        %v637 = vmul.f32 %v500, %v500
        %v638 = vmul.f32 %v503, %v503
        %v639 = vsel %vm505, %v607, 0.0
        %v640 = vsel %vm505, %v608, 0.0
        %v641 = vadd.f32 %v639, %v640
        %v642 = vsel %vm505, %v609, 0.0
        %v643 = vadd.f32 %v641, %v642
        %v644 = vsel %vm505, %v610, 0.0
        %v645 = vadd.f32 %v643, %v644
        %v646 = vsel %vm505, %v611, 0.0
        %v647 = vadd.f32 %v645, %v646
        %v648 = vsel %vm505, %v612, 0.0
        %v649 = vadd.f32 %v647, %v648
        %v650 = vsel %vm505, %v613, 0.0
        %v651 = vadd.f32 %v649, %v650
        %v652 = vsel %vm505, %v614, 0.0
        %v653 = vadd.f32 %v651, %v652
        %v654 = vsel %vm505, %v615, 0.0
        %v655 = vadd.f32 %v653, %v654
        %v656 = vsel %vm505, %v616, 0.0
        %v657 = vadd.f32 %v655, %v656
        %v658 = vsel %vm505, %v617, 0.0
        %v659 = vadd.f32 %v657, %v658
        %v660 = vsel %vm505, %v618, 0.0
        %v661 = vadd.f32 %v659, %v660
        %v662 = vsel %vm505, %v619, 0.0
        %v663 = vadd.f32 %v661, %v662
        %v664 = vsel %vm505, %v620, 0.0
        %v665 = vadd.f32 %v663, %v664
        %v666 = vsel %vm505, %v621, 0.0
        %v667 = vadd.f32 %v665, %v666
        %v668 = vsel %vm505, %v622, 0.0
        %v669 = vadd.f32 %v667, %v668
        %v670 = vsel %vm505, %v623, 0.0
        %v671 = vadd.f32 %v669, %v670
        %v672 = vsel %vm505, %v624, 0.0
        %v673 = vadd.f32 %v671, %v672
        %v674 = vsel %vm505, %v625, 0.0
        %v675 = vadd.f32 %v673, %v674
        %v676 = vsel %vm505, %v626, 0.0
        %v677 = vadd.f32 %v675, %v676
        %v678 = vsel %vm505, %v627, 0.0
        %v679 = vadd.f32 %v677, %v678
        %v680 = vsel %vm505, %v628, 0.0
        %v681 = vadd.f32 %v679, %v680
        %v682 = vsel %vm505, %v629, 0.0
        %v683 = vadd.f32 %v681, %v682
        %v684 = vsel %vm505, %v630, 0.0
        %v685 = vadd.f32 %v683, %v684
        %v686 = vsel %vm505, %v631, 0.0
        %v687 = vadd.f32 %v685, %v686
        %v688 = vsel %vm505, %v632, 0.0
        %v689 = vadd.f32 %v687, %v688
        %v690 = vsel %vm505, %v633, 0.0
        %v691 = vadd.f32 %v689, %v690
        %v692 = vsel %vm505, %v634, 0.0
        %v693 = vadd.f32 %v691, %v692
        %v694 = vsel %vm505, %v635, 0.0
        %v695 = vadd.f32 %v693, %v694
        %v696 = vsel %vm505, %v636, 0.0
        %v697 = vadd.f32 %v695, %v696
        %v698 = vsel %vm505, %v637, 0.0
        %v699 = vadd.f32 %v697, %v698
        %v700 = vsel %vm505, %v638, 0.0
        %v701 = vadd.f32 %v699, %v700
        %v702 = vrot.slane %v701, 4
        %v703 = vadd.f32 %v701, %v702
        %v704 = vrot.slane %v703, 2
        %v705 = vadd.f32 %v703, %v704
        %v706 = vrot.slane %v705, 1
        %v707 = vadd.f32 %v705, %v706
        %vm708 = vcmask 1040384
        %v709 = vsel %vm708, %v606, %v707
        %vm710 = vcmask 123904
        %711 = vst.msk [vmem:[%s229] sm:$0x3] %vm710, %v709
        %s712 = smul.u32 32, %s24
        %p713 = scmp.lt.s32.totalorder %s23, 1
        %s714 = scalar_select %p713, %s23, 1
        %p715 = scmp.lt.s32.totalorder %s712, 31
        %s716 = scalar_select %p715, %s712, 31
        %s717 = smul.addr %s714, 32
        %s718 = sadd.s32 %s716, %s717
        %s719 = smul.addr %s718, 8
        %s720 = scalar_lea.vmem %s3, %s719
        %s721 = sand.u32 %s139, 1
        %s722 = scalar_lea.sflag [#allocation3], %s721
        %s723 = sand.u32 %s139, 1
        %s724 = smul.addr %s723, 2
        %s725 = scalar_lea.vmem [#allocation2], %s724
        // Predicated region
        $region33: #{tpu_custom_call.1} parent=31 // pred_check
          %p726 = pneg %p121
        $region34: #{tpu_custom_call.1} parent=31 // pred_check_branch
          %728 = sbr.rel (%p726) target = $region36
        $region35: #{tpu_custom_call.1} parent=31 // pred_region
          %s729 = smul.u32 32, %s24
        $region36: #{tpu_custom_call.1} parent=31 // pred_fallthru
          _
        // Predicated region
        $region37: #{tpu_custom_call.1} parent=31 // pred_check
          %p730 = pneg %p149
        $region38: #{tpu_custom_call.1} parent=31 // pred_check_branch
          %732 = sbr.rel (%p730) target = $region40
        $region39: #{tpu_custom_call.1} parent=31 // pred_region
          %734 = vsyncadd %s722, 0
          %s735 = sadd.s32 %s24, %s23
          %s736 = smul.addr %s735, 2
          %s737 = scalar_lea.hbm %s4, %s736
          %s739 = sshll.u32 %s725, 4
          %s740 = int_to_ptr.vmem [resolvable:$true] %s739
          %s741 = sshll.u32 %s737, 4
          %s742 = int_to_ptr.hbm [resolvable:$true] %s741
          %744 = dma.vmem_to_hbm [thread:$0]  %s740, 32, %s742, %s722
        $region40: #{tpu_custom_call.1} parent=31 // pred_fallthru
          _
      $region32: #{tpu_custom_call.1} parent=5 // pred_fallthru
        _
      %p745 = scmp.le.s32.totalorder 2, %s14
      // Predicated region
      $region41: #{tpu_custom_call.1} parent=5 // pred_check
        %p746 = pneg %p745
      $region42: #{tpu_custom_call.1} parent=5 // pred_check_branch
        %748 = sbr.rel (%p746) target = $region44
      $region43: #{tpu_custom_call.1} parent=5 // pred_region
        %s749 = ssub.s32 %s14, 2
        // Predicated region
        $region45: #{tpu_custom_call.1} parent=43 // pred_check
          %p750 = pneg %p127
        $region46: #{tpu_custom_call.1} parent=43 // pred_check_branch
          %752 = sbr.rel (%p750) target = $region48
        $region47: #{tpu_custom_call.1} parent=43 // pred_region
          %s753 = smul.u32 32, %s26
          %p754 = scmp.lt.s32.totalorder %s25, 1
          %s755 = scalar_select %p754, %s25, 1
          %p756 = scmp.lt.s32.totalorder %s753, 31
          %s757 = scalar_select %p756, %s753, 31
          %s758 = smul.addr %s755, 32
          %s759 = sadd.s32 %s757, %s758
          %s760 = smul.addr %s759, 8
          %s761 = scalar_lea.vmem %s3, %s760
        $region48: #{tpu_custom_call.1} parent=43 // pred_fallthru
          _
        // Predicated region
        $region49: #{tpu_custom_call.1} parent=43 // pred_check
          %p762 = pneg %p155
        $region50: #{tpu_custom_call.1} parent=43 // pred_check_branch
          %764 = sbr.rel (%p762) target = $region52
        $region51: #{tpu_custom_call.1} parent=43 // pred_region
          %s765 = sand.u32 %s140, 1
          %s766 = scalar_lea.sflag [#allocation3], %s765
          %s767 = sand.u32 %s140, 1
          %s768 = smul.addr %s767, 2
          %s769 = scalar_lea.vmem [#allocation2], %s768
          %771 = dma.done %s766, 32
        $region52: #{tpu_custom_call.1} parent=43 // pred_fallthru
          _
      $region44: #{tpu_custom_call.1} parent=5 // pred_fallthru
        _
    $region6: #{tpu_custom_call.1} parent=1 // loop_footer
      %s18 = sadd.s32 1, %s14
    $region7: #{tpu_custom_call.1} parent=1 // loop_footer_branch
      %13 = sbr.rel target = $region3
    $region8: #{tpu_custom_call.1} parent=1 // loop_exit
      _
    %772 = vsyncpa [#allocation3], 1
    %s773 = scalar_lea.sflag [#allocation3], 1
    %774 = vsyncpa %s773, 1

</llo_original>
